<compile_context>
chip_gen: v7x
topology: tpu7x:2x2x1
jax: 0.10.0
libtpu: 0.0.40
codegen_flags: <defaults>
</compile_context>

<pallas_src>
import jax
import jax.numpy as jnp
from jax.experimental import pallas as pl
from jax.experimental.pallas import tpu as pltpu


def _interp_matrix(n_in: int, n_out: int) -> jnp.ndarray:
    """Row-stochastic (n_out, n_in) bilinear matrix, align_corners=True."""
    if n_in == 1:
        return jnp.ones((n_out, 1), dtype=jnp.float32)
    i = jnp.arange(n_out, dtype=jnp.float32)
    src = i * (n_in - 1) / (n_out - 1)          # output i -> source coordinate
    lo = jnp.clip(jnp.floor(src).astype(jnp.int32), 0, n_in - 2)
    frac = src - lo.astype(jnp.float32)
    cols = jnp.arange(n_in, dtype=jnp.int32)[None, :]
    w_lo = (cols == lo[:, None]).astype(jnp.float32) * (1.0 - frac)[:, None]
    w_hi = (cols == (lo + 1)[:, None]).astype(jnp.float32) * frac[:, None]
    return w_lo + w_hi                            # (n_out, n_in)


def _choose_bc(nc: int, plane_out_bytes: int, cap=None):
    """Planes per block: target ~2 MiB of output per grid step, sublane friendly."""
    target = max(1, (2 << 20) // max(int(plane_out_bytes), 1))
    if cap is not None:
        target = min(target, cap)
    if nc < 8:
        return nc, 1                              # block dim == full dim (allowed)
    bc = min(target, nc)
    if bc * 2 > nc:                               # prefer >=2 grid steps so both
        bc = -(-nc // 2)                          # v7x TensorCores get work
    bc = max(8, (bc // 8) * 8)                    # multiple of 8 sublanes
    grid = -(-nc // bc)
    return bc, grid


def _upsample_fused_kernel(x_ref, k_ref, o_ref):
    # x_ref: (Bc, H*W)   k_ref: (H*W, Hout*Wout)   o_ref: (Bc, Hout*Wout)
    k = k_ref[...]
    x = x_ref[...].astype(k.dtype)
    o_ref[...] = jnp.dot(x, k, preferred_element_type=jnp.float32).astype(o_ref.dtype)


def _upsample_separable_kernel(x_ref, wh_ref, wwt_ref, o_ref):
    # x_ref: (Bc, H, W)  wh_ref: (Hout, H)  wwt_ref: (W, Wout)  o_ref: (Bc, Hout, Wout)
    wh = wh_ref[...]
    wwt = wwt_ref[...]
    for i in range(x_ref.shape[0]):               # static unroll over planes in block
        x = x_ref[i].astype(jnp.float32)
        t = jnp.dot(wh, x, preferred_element_type=jnp.float32)        # (Hout, W)
        o_ref[i] = jnp.dot(t, wwt, preferred_element_type=jnp.float32).astype(o_ref.dtype)


_MAX_FUSED_K_BYTES = 8 << 20   # size limit for the fused interpolation matrix


def upsample_bilinear_2x(x: jnp.ndarray) -> jnp.ndarray:
    """x: (N, C, H, W) -> (N, C, 2H, 2W), bilinear, align_corners=True."""
    N, C, H, W = x.shape
    Hout, Wout = 2 * H, 2 * W
    nc = N * C
    itemsize = jnp.dtype(x.dtype).itemsize
    out_plane_bytes = Hout * Wout * itemsize

    wh = _interp_matrix(H, Hout)                  # (Hout, H)
    ww = _interp_matrix(W, Wout)                  # (Wout, W)

    # bf16 inputs -> bf16 MXU operands (f32 accumulation); otherwise f32.
    wdtype = jnp.bfloat16 if x.dtype == jnp.bfloat16 else jnp.float32

    compiler_params = pltpu.CompilerParams(
        dimension_semantics=("parallel",),
        vmem_limit_bytes=48 * 1024 * 1024,        # safe on v5e/v6e (128 MiB) and v7x (64 MiB)
    )

    fused_k_bytes = (H * W) * (Hout * Wout) * jnp.dtype(wdtype).itemsize
    if fused_k_bytes <= _MAX_FUSED_K_BYTES:
        # ---- fused single-matmul path (lane-dense flat planes) ----
        k = jnp.einsum("oh,pw->hwop", wh, ww).reshape(H * W, Hout * Wout).astype(wdtype)
        bc, grid = _choose_bc(nc, out_plane_bytes)
        nc_pad = bc * grid
        x_flat = x.reshape(nc, H * W)
        if nc_pad != nc:
            x_flat = jnp.pad(x_flat, ((0, nc_pad - nc), (0, 0)))
        out_flat = pl.pallas_call(
            _upsample_fused_kernel,
            out_shape=jax.ShapeDtypeStruct((nc_pad, Hout * Wout), x.dtype),
            grid=(grid,),
            in_specs=[
                pl.BlockSpec((bc, H * W), lambda b: (b, 0)),
                pl.BlockSpec((H * W, Hout * Wout), lambda b: (0, 0)),  # resident weights
            ],
            out_specs=pl.BlockSpec((bc, Hout * Wout), lambda b: (b, 0)),
            compiler_params=compiler_params,
        )(x_flat, k)
        return out_flat[:nc].reshape(N, C, Hout, Wout)

    # ---- fallback for large spatial sizes: separable matmuls, batched planes ----
    bc, grid = _choose_bc(nc, out_plane_bytes, cap=32)
    nc_pad = bc * grid
    x3 = x.reshape(nc, H, W)
    if nc_pad != nc:
        x3 = jnp.pad(x3, ((0, nc_pad - nc), (0, 0), (0, 0)))
    out3 = pl.pallas_call(
        _upsample_separable_kernel,
        out_shape=jax.ShapeDtypeStruct((nc_pad, Hout, Wout), x.dtype),
        grid=(grid,),
        in_specs=[
            pl.BlockSpec((bc, H, W), lambda b: (b, 0, 0)),
            pl.BlockSpec((Hout, H), lambda b: (0, 0)),
            pl.BlockSpec((W, Wout), lambda b: (0, 0)),
        ],
        out_specs=pl.BlockSpec((bc, Hout, Wout), lambda b: (b, 0, 0)),
        compiler_params=compiler_params,
    )(x3, wh, ww.T)
    return out3[:nc].reshape(N, C, Hout, Wout)


if __name__ == "__main__":
    key = jax.random.PRNGKey(0)
    N, C, H, W = 2, 4, 16, 16
    x = jax.random.normal(key, (N, C, H, W), dtype=jnp.float32)

    out = upsample_bilinear_2x(x)
    out = jax.block_until_ready(out)

    # reference: exact separable align_corners=True interpolation in plain JAX
    wh = _interp_matrix(H, 2 * H)
    ww = _interp_matrix(W, 2 * W)
    ref = jnp.einsum("oh,nchw,pw->ncop", wh, x, ww)
    assert out.shape == (N, C, 2 * H, 2 * W)
    assert jnp.allclose(out, ref, atol=1e-4, rtol=1e-4), float(jnp.max(jnp.abs(out - ref)))

    print("KERNEL_OK")
</pallas_src>

<mosaic_0001>
module attributes {stable_mosaic.version = 11 : i64} {
  func.func @_upsample_fused_kernel(%arg0: i32, %arg1: memref<8x256xf32, #tpu.memory_space<vmem>>, %arg2: memref<256x1024xf32, #tpu.memory_space<vmem>>, %arg3: memref<8x1024xf32, #tpu.memory_space<vmem>>) attributes {dimension_semantics = [#tpu.dimension_semantics<parallel>], iteration_bounds = array<i64: 1>, scalar_prefetch = 0 : i64, scratch_operands = 0 : i64, tpu.core_type = #tpu.core_type<tc>, window_params = [{transform_indices = @transform_0, window_bounds = array<i64: 8, 256>}, {pipeline_mode = #tpu.pipeline_mode<synchronous>, transform_indices = @transform_1, window_bounds = array<i64: 256, 1024>}, {transform_indices = @transform_2, window_bounds = array<i64: 8, 1024>}]} {
    %c0 = arith.constant 0 : index
    %c0_0 = arith.constant 0 : index
    %0 = vector.load %arg2[%c0, %c0_0] : memref<256x1024xf32, #tpu.memory_space<vmem>>, vector<256x1024xf32>
    %c0_1 = arith.constant 0 : index
    %c0_2 = arith.constant 0 : index
    %1 = vector.load %arg1[%c0_1, %c0_2] : memref<8x256xf32, #tpu.memory_space<vmem>>, vector<8x256xf32>
    %cst = arith.constant dense<0.000000e+00> : vector<8x1024xf32>
    %2 = tpu.matmul %1, %0, %cst {dimension_numbers = #tpu.dot_dimension_numbers<[1], [0], [0], [1], [0, 0, 1, 1], [], []>} : vector<8x256xf32>, vector<256x1024xf32>, vector<8x1024xf32> -> vector<8x1024xf32>
    %c0_3 = arith.constant 0 : index
    %c0_4 = arith.constant 0 : index
    %3 = vector.load %arg3[%c0_3, %c0_4] : memref<8x1024xf32, #tpu.memory_space<vmem>>, vector<8x1024xf32>
    tpu.vector_store %arg3[%c0_3, %c0_4], %2 {strides = array<i32>} : memref<8x1024xf32, #tpu.memory_space<vmem>>, vector<8x1024xf32>,
    return
  }
  func.func @transform_0(%arg0: i32) -> (i32, i32) {
    %c0_i32 = arith.constant 0 : i32
    %c0_i32_0 = arith.constant 0 : i32
    return %arg0, %c0_i32 : i32, i32
  }
  func.func @transform_1(%arg0: i32) -> (i32, i32) {
    %c0_i32 = arith.constant 0 : i32
    %c0_i32_0 = arith.constant 0 : i32
    %c0_i32_1 = arith.constant 0 : i32
    return %c0_i32, %c0_i32_0 : i32, i32
  }
  func.func @transform_2(%arg0: i32) -> (i32, i32) {
    %c0_i32 = arith.constant 0 : i32
    %c0_i32_0 = arith.constant 0 : i32
    return %arg0, %c0_i32 : i32, i32
  }
}

</mosaic_0001>

<llo_original>
// kernel: tpu_custom_call.1
$region0: #{tpu_custom_call.1}
  #allocation0 [shape = 'u32[]', space=smem, size = 0x4, offset = 0x4, fixed_abs, tag = 'smem constant byte address 0x4 - core index']
  #allocation1 [shape = 'u32[144,128]{1,0:T(1,128)}', space=vmem, size = 0x12000, scoped, tag = 'internal scratch']
  %s0 = inlined_call_operand.hbm [shape: f32[8,256], index: 0, kind: input, shape index: {}]
  %s1 = inlined_call_operand.hbm [shape: f32[256,1024], index: 1, kind: input, shape index: {}]
  %s2 = inlined_call_operand.hbm [shape: f32[8,1024], index: 2, kind: output, shape index: {}]
  %s3 = sld [smem:[#allocation0]]
  $region26: #{tpu_custom_call.1} parent=0
    _
  %s5 = ssub.s32 1, %s3
  %s6 = scalar_select 0, %s5, %s3
  $region1: #{tpu_custom_call.1} parent=0
    #allocation2 [shape = 'u8[8192]{0}', space=vmem, size = 0x2000, scoped, tag = 'input window, operand 0, single buffered']
    #allocation3 [shape = 's32[1]{0}', space=sflag, size = 0x4, scoped, tag = 'scoped memory for tpu_custom_call.1']
    #allocation4 [shape = 's32[1]{0}', space=sflag, size = 0x4, scoped, tag = 'scoped memory for tpu_custom_call.1']
    #allocation5 [shape = 'u8[1048576]{0}', space=vmem, size = 0x100000, scoped, tag = 'input window, operand 1, single buffered']
    #allocation6 [shape = 's32[1]{0}', space=sflag, size = 0x4, scoped, tag = 'scoped memory for tpu_custom_call.1']
    #allocation7 [shape = 'u8[32768]{0}', space=vmem, size = 0x8000, scoped, tag = 'output window, operand 0, single buffered']
    %7 = vsyncpa [#allocation3], 0
    %8 = vsyncpa [#allocation6], 0
    %9 = vsyncpa [#allocation4], 0
    // Predicated region
    $region2: #{tpu_custom_call.1} parent=1 // pred_check
      _
    $region3: #{tpu_custom_call.1} parent=1 // pred_check_branch
      %11 = sbr.rel (0) target = $region5
    $region4: #{tpu_custom_call.1} parent=1 // pred_region
      %s13 = ssub.s32 256, 256
      %14 = vsyncadd [#allocation3], %s13
      %s16 = sshll.u32 [#allocation2], 4
      %s17 = int_to_ptr.vmem [resolvable:$true] %s16
      %19 = dma.hbm_to_vmem [thread:$0]  %s0, 256, %s17, [#allocation3]
    $region5: #{tpu_custom_call.1} parent=1 // pred_fallthru
      _
    // Predicated region
    $region6: #{tpu_custom_call.1} parent=1 // pred_check
      _
    $region7: #{tpu_custom_call.1} parent=1 // pred_check_branch
      %21 = sbr.rel (0) target = $region9
    $region8: #{tpu_custom_call.1} parent=1 // pred_region
      %s23 = ssub.s32 32768, 32768
      %24 = vsyncadd [#allocation6], %s23
      %s25 = sshll.u32 [#allocation5], 4
      %s26 = int_to_ptr.vmem [resolvable:$true] %s25
      %31 = dma.hbm_to_vmem [thread:$0]  %s1, 32768, %s26, [#allocation6], 1024, 1024, 64
    $region9: #{tpu_custom_call.1} parent=1 // pred_fallthru
      _
    // Predicated region
    $region10: #{tpu_custom_call.1} parent=1 // pred_check
      _
    $region11: #{tpu_custom_call.1} parent=1 // pred_check_branch
      %33 = sbr.rel (0) target = $region13
    $region12: #{tpu_custom_call.1} parent=1 // pred_region
      %34 = dma.done [#allocation3], 256
    $region13: #{tpu_custom_call.1} parent=1 // pred_fallthru
      _
    // Predicated region
    $region14: #{tpu_custom_call.1} parent=1 // pred_check
      _
    $region15: #{tpu_custom_call.1} parent=1 // pred_check_branch
      %36 = sbr.rel (0) target = $region17
    $region16: #{tpu_custom_call.1} parent=1 // pred_region
      %37 = dma.done [#allocation6], 32768
    $region17: #{tpu_custom_call.1} parent=1 // pred_fallthru
      _
    %v38 = vld [vmem:[#allocation5] sm:$0xff]
    %v39 = vld [vmem:[#allocation5 + $0x8] sm:$0xff]
    %v40 = vld [vmem:[#allocation5 + $0x10] sm:$0xff]
    %v41 = vld [vmem:[#allocation5 + $0x18] sm:$0xff]
    %v42 = vld [vmem:[#allocation5 + $0x20] sm:$0xff]
    %v43 = vld [vmem:[#allocation5 + $0x28] sm:$0xff]
    %v44 = vld [vmem:[#allocation5 + $0x30] sm:$0xff]
    %v45 = vld [vmem:[#allocation5 + $0x38] sm:$0xff]
    %v46 = vld [vmem:[#allocation5 + $0x40] sm:$0xff]
    %v47 = vld [vmem:[#allocation5 + $0x48] sm:$0xff]
    %v48 = vld [vmem:[#allocation5 + $0x50] sm:$0xff]
    %v49 = vld [vmem:[#allocation5 + $0x58] sm:$0xff]
    %v50 = vld [vmem:[#allocation5 + $0x60] sm:$0xff]
    %v51 = vld [vmem:[#allocation5 + $0x68] sm:$0xff]
    %v52 = vld [vmem:[#allocation5 + $0x70] sm:$0xff]
    %v53 = vld [vmem:[#allocation5 + $0x78] sm:$0xff]
    %v54 = vld [vmem:[#allocation5 + $0x80] sm:$0xff]
    %v55 = vld [vmem:[#allocation5 + $0x88] sm:$0xff]
    %v56 = vld [vmem:[#allocation5 + $0x90] sm:$0xff]
    %v57 = vld [vmem:[#allocation5 + $0x98] sm:$0xff]
    %v58 = vld [vmem:[#allocation5 + $0xa0] sm:$0xff]
    %v59 = vld [vmem:[#allocation5 + $0xa8] sm:$0xff]
    %v60 = vld [vmem:[#allocation5 + $0xb0] sm:$0xff]
    %v61 = vld [vmem:[#allocation5 + $0xb8] sm:$0xff]
    %v62 = vld [vmem:[#allocation5 + $0xc0] sm:$0xff]
    %v63 = vld [vmem:[#allocation5 + $0xc8] sm:$0xff]
    %v64 = vld [vmem:[#allocation5 + $0xd0] sm:$0xff]
    %v65 = vld [vmem:[#allocation5 + $0xd8] sm:$0xff]
    %v66 = vld [vmem:[#allocation5 + $0xe0] sm:$0xff]
    %v67 = vld [vmem:[#allocation5 + $0xe8] sm:$0xff]
    %v68 = vld [vmem:[#allocation5 + $0xf0] sm:$0xff]
    %v69 = vld [vmem:[#allocation5 + $0xf8] sm:$0xff]
    %v70 = vld [vmem:[#allocation5 + $0x100] sm:$0xff]
    %v71 = vld [vmem:[#allocation5 + $0x108] sm:$0xff]
    %v72 = vld [vmem:[#allocation5 + $0x110] sm:$0xff]
    %v73 = vld [vmem:[#allocation5 + $0x118] sm:$0xff]
    %v74 = vld [vmem:[#allocation5 + $0x120] sm:$0xff]
    %v75 = vld [vmem:[#allocation5 + $0x128] sm:$0xff]
    %v76 = vld [vmem:[#allocation5 + $0x130] sm:$0xff]
    %v77 = vld [vmem:[#allocation5 + $0x138] sm:$0xff]
    %v78 = vld [vmem:[#allocation5 + $0x140] sm:$0xff]
    %v79 = vld [vmem:[#allocation5 + $0x148] sm:$0xff]
    %v80 = vld [vmem:[#allocation5 + $0x150] sm:$0xff]
    %v81 = vld [vmem:[#allocation5 + $0x158] sm:$0xff]
    %v82 = vld [vmem:[#allocation5 + $0x160] sm:$0xff]
    %v83 = vld [vmem:[#allocation5 + $0x168] sm:$0xff]
    %v84 = vld [vmem:[#allocation5 + $0x170] sm:$0xff]
    %v85 = vld [vmem:[#allocation5 + $0x178] sm:$0xff]
    %v86 = vld [vmem:[#allocation5 + $0x180] sm:$0xff]
    %v87 = vld [vmem:[#allocation5 + $0x188] sm:$0xff]
    %v88 = vld [vmem:[#allocation5 + $0x190] sm:$0xff]
    %v89 = vld [vmem:[#allocation5 + $0x198] sm:$0xff]
    %v90 = vld [vmem:[#allocation5 + $0x1a0] sm:$0xff]
    %v91 = vld [vmem:[#allocation5 + $0x1a8] sm:$0xff]
    %v92 = vld [vmem:[#allocation5 + $0x1b0] sm:$0xff]
    %v93 = vld [vmem:[#allocation5 + $0x1b8] sm:$0xff]
    %v94 = vld [vmem:[#allocation5 + $0x1c0] sm:$0xff]
    %v95 = vld [vmem:[#allocation5 + $0x1c8] sm:$0xff]
    %v96 = vld [vmem:[#allocation5 + $0x1d0] sm:$0xff]
    %v97 = vld [vmem:[#allocation5 + $0x1d8] sm:$0xff]
    %v98 = vld [vmem:[#allocation5 + $0x1e0] sm:$0xff]
    %v99 = vld [vmem:[#allocation5 + $0x1e8] sm:$0xff]
    %v100 = vld [vmem:[#allocation5 + $0x1f0] sm:$0xff]
    %v101 = vld [vmem:[#allocation5 + $0x1f8] sm:$0xff]
    %v102 = vld [vmem:[#allocation5 + $0x200] sm:$0xff]
    %v103 = vld [vmem:[#allocation5 + $0x208] sm:$0xff]
    %v104 = vld [vmem:[#allocation5 + $0x210] sm:$0xff]
    %v105 = vld [vmem:[#allocation5 + $0x218] sm:$0xff]
    %v106 = vld [vmem:[#allocation5 + $0x220] sm:$0xff]
    %v107 = vld [vmem:[#allocation5 + $0x228] sm:$0xff]
    %v108 = vld [vmem:[#allocation5 + $0x230] sm:$0xff]
    %v109 = vld [vmem:[#allocation5 + $0x238] sm:$0xff]
    %v110 = vld [vmem:[#allocation5 + $0x240] sm:$0xff]
    %v111 = vld [vmem:[#allocation5 + $0x248] sm:$0xff]
    %v112 = vld [vmem:[#allocation5 + $0x250] sm:$0xff]
    %v113 = vld [vmem:[#allocation5 + $0x258] sm:$0xff]
    %v114 = vld [vmem:[#allocation5 + $0x260] sm:$0xff]
    %v115 = vld [vmem:[#allocation5 + $0x268] sm:$0xff]
    %v116 = vld [vmem:[#allocation5 + $0x270] sm:$0xff]
    %v117 = vld [vmem:[#allocation5 + $0x278] sm:$0xff]
    %v118 = vld [vmem:[#allocation5 + $0x280] sm:$0xff]
    %v119 = vld [vmem:[#allocation5 + $0x288] sm:$0xff]
    %v120 = vld [vmem:[#allocation5 + $0x290] sm:$0xff]
    %v121 = vld [vmem:[#allocation5 + $0x298] sm:$0xff]
    %v122 = vld [vmem:[#allocation5 + $0x2a0] sm:$0xff]
    %v123 = vld [vmem:[#allocation5 + $0x2a8] sm:$0xff]
    %v124 = vld [vmem:[#allocation5 + $0x2b0] sm:$0xff]
    %v125 = vld [vmem:[#allocation5 + $0x2b8] sm:$0xff]
    %v126 = vld [vmem:[#allocation5 + $0x2c0] sm:$0xff]
    %v127 = vld [vmem:[#allocation5 + $0x2c8] sm:$0xff]
    %v128 = vld [vmem:[#allocation5 + $0x2d0] sm:$0xff]
    %v129 = vld [vmem:[#allocation5 + $0x2d8] sm:$0xff]
    %v130 = vld [vmem:[#allocation5 + $0x2e0] sm:$0xff]
    %v131 = vld [vmem:[#allocation5 + $0x2e8] sm:$0xff]
    %v132 = vld [vmem:[#allocation5 + $0x2f0] sm:$0xff]
    %v133 = vld [vmem:[#allocation5 + $0x2f8] sm:$0xff]
    %v134 = vld [vmem:[#allocation5 + $0x300] sm:$0xff]
    %v135 = vld [vmem:[#allocation5 + $0x308] sm:$0xff]
    %v136 = vld [vmem:[#allocation5 + $0x310] sm:$0xff]
    %v137 = vld [vmem:[#allocation5 + $0x318] sm:$0xff]
    %v138 = vld [vmem:[#allocation5 + $0x320] sm:$0xff]
    %v139 = vld [vmem:[#allocation5 + $0x328] sm:$0xff]
    %v140 = vld [vmem:[#allocation5 + $0x330] sm:$0xff]
    %v141 = vld [vmem:[#allocation5 + $0x338] sm:$0xff]
    %v142 = vld [vmem:[#allocation5 + $0x340] sm:$0xff]
    %v143 = vld [vmem:[#allocation5 + $0x348] sm:$0xff]
    %v144 = vld [vmem:[#allocation5 + $0x350] sm:$0xff]
    %v145 = vld [vmem:[#allocation5 + $0x358] sm:$0xff]
    %v146 = vld [vmem:[#allocation5 + $0x360] sm:$0xff]
    %v147 = vld [vmem:[#allocation5 + $0x368] sm:$0xff]
    %v148 = vld [vmem:[#allocation5 + $0x370] sm:$0xff]
    %v149 = vld [vmem:[#allocation5 + $0x378] sm:$0xff]
    %v150 = vld [vmem:[#allocation5 + $0x380] sm:$0xff]
    %v151 = vld [vmem:[#allocation5 + $0x388] sm:$0xff]
    %v152 = vld [vmem:[#allocation5 + $0x390] sm:$0xff]
    %v153 = vld [vmem:[#allocation5 + $0x398] sm:$0xff]
    %v154 = vld [vmem:[#allocation5 + $0x3a0] sm:$0xff]
    %v155 = vld [vmem:[#allocation5 + $0x3a8] sm:$0xff]
    %v156 = vld [vmem:[#allocation5 + $0x3b0] sm:$0xff]
    %v157 = vld [vmem:[#allocation5 + $0x3b8] sm:$0xff]
    %v158 = vld [vmem:[#allocation5 + $0x3c0] sm:$0xff]
    %v159 = vld [vmem:[#allocation5 + $0x3c8] sm:$0xff]
    %v160 = vld [vmem:[#allocation5 + $0x3d0] sm:$0xff]
    %v161 = vld [vmem:[#allocation5 + $0x3d8] sm:$0xff]
    %v162 = vld [vmem:[#allocation5 + $0x3e0] sm:$0xff]
    %v163 = vld [vmem:[#allocation5 + $0x3e8] sm:$0xff]
    %v164 = vld [vmem:[#allocation5 + $0x3f0] sm:$0xff]
    %v165 = vld [vmem:[#allocation5 + $0x3f8] sm:$0xff]
    %v166 = vld [vmem:[#allocation5 + $0x400] sm:$0xff]
    %v167 = vld [vmem:[#allocation5 + $0x408] sm:$0xff]
    %v168 = vld [vmem:[#allocation5 + $0x410] sm:$0xff]
    %v169 = vld [vmem:[#allocation5 + $0x418] sm:$0xff]
    %v170 = vld [vmem:[#allocation5 + $0x420] sm:$0xff]
    %v171 = vld [vmem:[#allocation5 + $0x428] sm:$0xff]
    %v172 = vld [vmem:[#allocation5 + $0x430] sm:$0xff]
    %v173 = vld [vmem:[#allocation5 + $0x438] sm:$0xff]
    %v174 = vld [vmem:[#allocation5 + $0x440] sm:$0xff]
    %v175 = vld [vmem:[#allocation5 + $0x448] sm:$0xff]
    %v176 = vld [vmem:[#allocation5 + $0x450] sm:$0xff]
    %v177 = vld [vmem:[#allocation5 + $0x458] sm:$0xff]
    %v178 = vld [vmem:[#allocation5 + $0x460] sm:$0xff]
    %v179 = vld [vmem:[#allocation5 + $0x468] sm:$0xff]
    %v180 = vld [vmem:[#allocation5 + $0x470] sm:$0xff]
    %v181 = vld [vmem:[#allocation5 + $0x478] sm:$0xff]
    %v182 = vld [vmem:[#allocation5 + $0x480] sm:$0xff]
    %v183 = vld [vmem:[#allocation5 + $0x488] sm:$0xff]
    %v184 = vld [vmem:[#allocation5 + $0x490] sm:$0xff]
    %v185 = vld [vmem:[#allocation5 + $0x498] sm:$0xff]
    %v186 = vld [vmem:[#allocation5 + $0x4a0] sm:$0xff]
    %v187 = vld [vmem:[#allocation5 + $0x4a8] sm:$0xff]
    %v188 = vld [vmem:[#allocation5 + $0x4b0] sm:$0xff]
    %v189 = vld [vmem:[#allocation5 + $0x4b8] sm:$0xff]
    %v190 = vld [vmem:[#allocation5 + $0x4c0] sm:$0xff]
    %v191 = vld [vmem:[#allocation5 + $0x4c8] sm:$0xff]
    %v192 = vld [vmem:[#allocation5 + $0x4d0] sm:$0xff]
    %v193 = vld [vmem:[#allocation5 + $0x4d8] sm:$0xff]
    %v194 = vld [vmem:[#allocation5 + $0x4e0] sm:$0xff]
    %v195 = vld [vmem:[#allocation5 + $0x4e8] sm:$0xff]
    %v196 = vld [vmem:[#allocation5 + $0x4f0] sm:$0xff]
    %v197 = vld [vmem:[#allocation5 + $0x4f8] sm:$0xff]
    %v198 = vld [vmem:[#allocation5 + $0x500] sm:$0xff]
    %v199 = vld [vmem:[#allocation5 + $0x508] sm:$0xff]
    %v200 = vld [vmem:[#allocation5 + $0x510] sm:$0xff]
    %v201 = vld [vmem:[#allocation5 + $0x518] sm:$0xff]
    %v202 = vld [vmem:[#allocation5 + $0x520] sm:$0xff]
    %v203 = vld [vmem:[#allocation5 + $0x528] sm:$0xff]
    %v204 = vld [vmem:[#allocation5 + $0x530] sm:$0xff]
    %v205 = vld [vmem:[#allocation5 + $0x538] sm:$0xff]
    %v206 = vld [vmem:[#allocation5 + $0x540] sm:$0xff]
    %v207 = vld [vmem:[#allocation5 + $0x548] sm:$0xff]
    %v208 = vld [vmem:[#allocation5 + $0x550] sm:$0xff]
    %v209 = vld [vmem:[#allocation5 + $0x558] sm:$0xff]
    %v210 = vld [vmem:[#allocation5 + $0x560] sm:$0xff]
    %v211 = vld [vmem:[#allocation5 + $0x568] sm:$0xff]
    %v212 = vld [vmem:[#allocation5 + $0x570] sm:$0xff]
    %v213 = vld [vmem:[#allocation5 + $0x578] sm:$0xff]
    %v214 = vld [vmem:[#allocation5 + $0x580] sm:$0xff]
    %v215 = vld [vmem:[#allocation5 + $0x588] sm:$0xff]
    %v216 = vld [vmem:[#allocation5 + $0x590] sm:$0xff]
    %v217 = vld [vmem:[#allocation5 + $0x598] sm:$0xff]
    %v218 = vld [vmem:[#allocation5 + $0x5a0] sm:$0xff]
    %v219 = vld [vmem:[#allocation5 + $0x5a8] sm:$0xff]
    %v220 = vld [vmem:[#allocation5 + $0x5b0] sm:$0xff]
    %v221 = vld [vmem:[#allocation5 + $0x5b8] sm:$0xff]
    %v222 = vld [vmem:[#allocation5 + $0x5c0] sm:$0xff]
    %v223 = vld [vmem:[#allocation5 + $0x5c8] sm:$0xff]
    %v224 = vld [vmem:[#allocation5 + $0x5d0] sm:$0xff]
    %v225 = vld [vmem:[#allocation5 + $0x5d8] sm:$0xff]
    %v226 = vld [vmem:[#allocation5 + $0x5e0] sm:$0xff]
    %v227 = vld [vmem:[#allocation5 + $0x5e8] sm:$0xff]
    %v228 = vld [vmem:[#allocation5 + $0x5f0] sm:$0xff]
    %v229 = vld [vmem:[#allocation5 + $0x5f8] sm:$0xff]
    %v230 = vld [vmem:[#allocation5 + $0x600] sm:$0xff]
    %v231 = vld [vmem:[#allocation5 + $0x608] sm:$0xff]
    %v232 = vld [vmem:[#allocation5 + $0x610] sm:$0xff]
    %v233 = vld [vmem:[#allocation5 + $0x618] sm:$0xff]
    %v234 = vld [vmem:[#allocation5 + $0x620] sm:$0xff]
    %v235 = vld [vmem:[#allocation5 + $0x628] sm:$0xff]
    %v236 = vld [vmem:[#allocation5 + $0x630] sm:$0xff]
    %v237 = vld [vmem:[#allocation5 + $0x638] sm:$0xff]
    %v238 = vld [vmem:[#allocation5 + $0x640] sm:$0xff]
    %v239 = vld [vmem:[#allocation5 + $0x648] sm:$0xff]
    %v240 = vld [vmem:[#allocation5 + $0x650] sm:$0xff]
    %v241 = vld [vmem:[#allocation5 + $0x658] sm:$0xff]
    %v242 = vld [vmem:[#allocation5 + $0x660] sm:$0xff]
    %v243 = vld [vmem:[#allocation5 + $0x668] sm:$0xff]
    %v244 = vld [vmem:[#allocation5 + $0x670] sm:$0xff]
    %v245 = vld [vmem:[#allocation5 + $0x678] sm:$0xff]
    %v246 = vld [vmem:[#allocation5 + $0x680] sm:$0xff]
    %v247 = vld [vmem:[#allocation5 + $0x688] sm:$0xff]
    %v248 = vld [vmem:[#allocation5 + $0x690] sm:$0xff]
    %v249 = vld [vmem:[#allocation5 + $0x698] sm:$0xff]
    %v250 = vld [vmem:[#allocation5 + $0x6a0] sm:$0xff]
    %v251 = vld [vmem:[#allocation5 + $0x6a8] sm:$0xff]
    %v252 = vld [vmem:[#allocation5 + $0x6b0] sm:$0xff]
    %v253 = vld [vmem:[#allocation5 + $0x6b8] sm:$0xff]
    %v254 = vld [vmem:[#allocation5 + $0x6c0] sm:$0xff]
    %v255 = vld [vmem:[#allocation5 + $0x6c8] sm:$0xff]
    %v256 = vld [vmem:[#allocation5 + $0x6d0] sm:$0xff]
    %v257 = vld [vmem:[#allocation5 + $0x6d8] sm:$0xff]
    %v258 = vld [vmem:[#allocation5 + $0x6e0] sm:$0xff]
    %v259 = vld [vmem:[#allocation5 + $0x6e8] sm:$0xff]
    %v260 = vld [vmem:[#allocation5 + $0x6f0] sm:$0xff]
    %v261 = vld [vmem:[#allocation5 + $0x6f8] sm:$0xff]
    %v262 = vld [vmem:[#allocation5 + $0x700] sm:$0xff]
    %v263 = vld [vmem:[#allocation5 + $0x708] sm:$0xff]
    %v264 = vld [vmem:[#allocation5 + $0x710] sm:$0xff]
    %v265 = vld [vmem:[#allocation5 + $0x718] sm:$0xff]
    %v266 = vld [vmem:[#allocation5 + $0x720] sm:$0xff]
    %v267 = vld [vmem:[#allocation5 + $0x728] sm:$0xff]
    %v268 = vld [vmem:[#allocation5 + $0x730] sm:$0xff]
    %v269 = vld [vmem:[#allocation5 + $0x738] sm:$0xff]
    %v270 = vld [vmem:[#allocation5 + $0x740] sm:$0xff]
    %v271 = vld [vmem:[#allocation5 + $0x748] sm:$0xff]
    %v272 = vld [vmem:[#allocation5 + $0x750] sm:$0xff]
    %v273 = vld [vmem:[#allocation5 + $0x758] sm:$0xff]
    %v274 = vld [vmem:[#allocation5 + $0x760] sm:$0xff]
    %v275 = vld [vmem:[#allocation5 + $0x768] sm:$0xff]
    %v276 = vld [vmem:[#allocation5 + $0x770] sm:$0xff]
    %v277 = vld [vmem:[#allocation5 + $0x778] sm:$0xff]
    %v278 = vld [vmem:[#allocation5 + $0x780] sm:$0xff]
    %v279 = vld [vmem:[#allocation5 + $0x788] sm:$0xff]
    %v280 = vld [vmem:[#allocation5 + $0x790] sm:$0xff]
    %v281 = vld [vmem:[#allocation5 + $0x798] sm:$0xff]
    %v282 = vld [vmem:[#allocation5 + $0x7a0] sm:$0xff]
    %v283 = vld [vmem:[#allocation5 + $0x7a8] sm:$0xff]
    %v284 = vld [vmem:[#allocation5 + $0x7b0] sm:$0xff]
    %v285 = vld [vmem:[#allocation5 + $0x7b8] sm:$0xff]
    %v286 = vld [vmem:[#allocation5 + $0x7c0] sm:$0xff]
    %v287 = vld [vmem:[#allocation5 + $0x7c8] sm:$0xff]
    %v288 = vld [vmem:[#allocation5 + $0x7d0] sm:$0xff]
    %v289 = vld [vmem:[#allocation5 + $0x7d8] sm:$0xff]
    %v290 = vld [vmem:[#allocation5 + $0x7e0] sm:$0xff]
    %v291 = vld [vmem:[#allocation5 + $0x7e8] sm:$0xff]
    %v292 = vld [vmem:[#allocation5 + $0x7f0] sm:$0xff]
    %v293 = vld [vmem:[#allocation5 + $0x7f8] sm:$0xff]
    %v294 = vld [vmem:[#allocation2] sm:$0xff]
    %v295 = vld [vmem:[#allocation2 + $0x8] sm:$0xff]
    %296 = vmatprep.subr.mxu0 %v39
    %297 = vmatpush1.msra.mxu0 %v38
    %298 = vmatprep.subr.mxu0 %v47
    %299 = vmatpush1.msra.mxu0 %v46
    %300 = vmatprep.subr.mxu0 %v55
    %301 = vmatpush1.msra.mxu0 %v54
    %302 = vmatprep.subr.mxu0 %v63
    %303 = vmatpush1.msra.mxu0 %v62
    %304 = vmatprep.subr.mxu0 %v71
    %305 = vmatpush1.msra.mxu0 %v70
    %306 = vmatprep.subr.mxu0 %v79
    %307 = vmatpush1.msra.mxu0 %v78
    %308 = vmatprep.subr.mxu0 %v87
    %309 = vmatpush1.msra.mxu0 %v86
    %310 = vmatprep.subr.mxu0 %v95
    %311 = vmatpush1.msra.mxu0 %v94
    %312 = vmatprep.subr.mxu0 %v103
    %313 = vmatpush1.msra.mxu0 %v102
    %314 = vmatprep.subr.mxu0 %v111
    %315 = vmatpush1.msra.mxu0 %v110
    %316 = vmatprep.subr.mxu0 %v119
    %317 = vmatpush1.msra.mxu0 %v118
    %318 = vmatprep.subr.mxu0 %v127
    %319 = vmatpush1.msra.mxu0 %v126
    %320 = vmatprep.subr.mxu0 %v135
    %321 = vmatpush1.msra.mxu0 %v134
    %322 = vmatprep.subr.mxu0 %v143
    %323 = vmatpush1.msra.mxu0 %v142
    %324 = vmatprep.subr.mxu0 %v151
    %325 = vmatpush1.msra.mxu0 %v150
    %326 = vmatprep.subr.mxu0 %v159
    %327 = vmatpush1.msra.mxu0 %v158
    %328 = vmatprep.subr.mxu0 %v167
    %329 = vmatpush1.msra.mxu0 %v166
    %330 = vmatprep.subr.mxu0 %v175
    %331 = vmatpush1.msra.mxu0 %v174
    %332 = vmatprep.subr.mxu0 %v183
    %333 = vmatpush1.msra.mxu0 %v182
    %334 = vmatprep.subr.mxu0 %v191
    %335 = vmatpush1.msra.mxu0 %v190
    %336 = vmatprep.subr.mxu0 %v199
    %337 = vmatpush1.msra.mxu0 %v198
    %338 = vmatprep.subr.mxu0 %v207
    %339 = vmatpush1.msra.mxu0 %v206
    %340 = vmatprep.subr.mxu0 %v215
    %341 = vmatpush1.msra.mxu0 %v214
    %342 = vmatprep.subr.mxu0 %v223
    %343 = vmatpush1.msra.mxu0 %v222
    %344 = vmatprep.subr.mxu0 %v231
    %345 = vmatpush1.msra.mxu0 %v230
    %346 = vmatprep.subr.mxu0 %v239
    %347 = vmatpush1.msra.mxu0 %v238
    %348 = vmatprep.subr.mxu0 %v247
    %349 = vmatpush1.msra.mxu0 %v246
    %350 = vmatprep.subr.mxu0 %v255
    %351 = vmatpush1.msra.mxu0 %v254
    %352 = vmatprep.subr.mxu0 %v263
    %353 = vmatpush1.msra.mxu0 %v262
    %354 = vmatprep.subr.mxu0 %v271
    %355 = vmatpush1.msra.mxu0 %v270
    %356 = vmatprep.subr.mxu0 %v279
    %357 = vmatpush1.msra.mxu0 %v278
    %358 = vmatprep.subr.mxu0 %v287
    %359 = vmatpush1.msra.mxu0 %v286
    %360 = vmatprep.mubr.f32.mxu0 %v295
    %361 = vmatmul.mubr.f32.gmra.mrb[0].mxu0 %v294
    %v362 = vpop.f32.mrb[0].mxu0
    %v363 = vadd.f32 0.0, %v362
    %v364 = vpop.f32.mrb[0].mxu0
    %v365 = vadd.f32 0.0, %v364
    %366 = vdwg.mxu0
    %367 = vmatprep.subr.mxu0 %v41
    %368 = vmatpush1.msra.mxu0 %v40
    %369 = vmatprep.subr.mxu0 %v49
    %370 = vmatpush1.msra.mxu0 %v48
    %371 = vmatprep.subr.mxu0 %v57
    %372 = vmatpush1.msra.mxu0 %v56
    %373 = vmatprep.subr.mxu0 %v65
    %374 = vmatpush1.msra.mxu0 %v64
    %375 = vmatprep.subr.mxu0 %v73
    %376 = vmatpush1.msra.mxu0 %v72
    %377 = vmatprep.subr.mxu0 %v81
    %378 = vmatpush1.msra.mxu0 %v80
    %379 = vmatprep.subr.mxu0 %v89
    %380 = vmatpush1.msra.mxu0 %v88
    %381 = vmatprep.subr.mxu0 %v97
    %382 = vmatpush1.msra.mxu0 %v96
    %383 = vmatprep.subr.mxu0 %v105
    %384 = vmatpush1.msra.mxu0 %v104
    %385 = vmatprep.subr.mxu0 %v113
    %386 = vmatpush1.msra.mxu0 %v112
    %387 = vmatprep.subr.mxu0 %v121
    %388 = vmatpush1.msra.mxu0 %v120
    %389 = vmatprep.subr.mxu0 %v129
    %390 = vmatpush1.msra.mxu0 %v128
    %391 = vmatprep.subr.mxu0 %v137
    %392 = vmatpush1.msra.mxu0 %v136
    %393 = vmatprep.subr.mxu0 %v145
    %394 = vmatpush1.msra.mxu0 %v144
    %395 = vmatprep.subr.mxu0 %v153
    %396 = vmatpush1.msra.mxu0 %v152
    %397 = vmatprep.subr.mxu0 %v161
    %398 = vmatpush1.msra.mxu0 %v160
    %399 = vmatprep.subr.mxu0 %v169
    %400 = vmatpush1.msra.mxu0 %v168
    %401 = vmatprep.subr.mxu0 %v177
    %402 = vmatpush1.msra.mxu0 %v176
    %403 = vmatprep.subr.mxu0 %v185
    %404 = vmatpush1.msra.mxu0 %v184
    %405 = vmatprep.subr.mxu0 %v193
    %406 = vmatpush1.msra.mxu0 %v192
    %407 = vmatprep.subr.mxu0 %v201
    %408 = vmatpush1.msra.mxu0 %v200
    %409 = vmatprep.subr.mxu0 %v209
    %410 = vmatpush1.msra.mxu0 %v208
    %411 = vmatprep.subr.mxu0 %v217
    %412 = vmatpush1.msra.mxu0 %v216
    %413 = vmatprep.subr.mxu0 %v225
    %414 = vmatpush1.msra.mxu0 %v224
    %415 = vmatprep.subr.mxu0 %v233
    %416 = vmatpush1.msra.mxu0 %v232
    %417 = vmatprep.subr.mxu0 %v241
    %418 = vmatpush1.msra.mxu0 %v240
    %419 = vmatprep.subr.mxu0 %v249
    %420 = vmatpush1.msra.mxu0 %v248
    %421 = vmatprep.subr.mxu0 %v257
    %422 = vmatpush1.msra.mxu0 %v256
    %423 = vmatprep.subr.mxu0 %v265
    %424 = vmatpush1.msra.mxu0 %v264
    %425 = vmatprep.subr.mxu0 %v273
    %426 = vmatpush1.msra.mxu0 %v272
    %427 = vmatprep.subr.mxu0 %v281
    %428 = vmatpush1.msra.mxu0 %v280
    %429 = vmatprep.subr.mxu0 %v289
    %430 = vmatpush1.msra.mxu0 %v288
    %431 = vmatprep.mubr.f32.mxu0 %v295
    %432 = vmatmul.mubr.f32.gmra.mrb[0].mxu0 %v294
    %v433 = vpop.f32.mrb[0].mxu0
    %v434 = vadd.f32 0.0, %v433
    %v435 = vpop.f32.mrb[0].mxu0
    %v436 = vadd.f32 0.0, %v435
    %437 = vdwg.mxu0
    %438 = vmatprep.subr.mxu0 %v43
    %439 = vmatpush1.msra.mxu0 %v42
    %440 = vmatprep.subr.mxu0 %v51
    %441 = vmatpush1.msra.mxu0 %v50
    %442 = vmatprep.subr.mxu0 %v59
    %443 = vmatpush1.msra.mxu0 %v58
    %444 = vmatprep.subr.mxu0 %v67
    %445 = vmatpush1.msra.mxu0 %v66
    %446 = vmatprep.subr.mxu0 %v75
    %447 = vmatpush1.msra.mxu0 %v74
    %448 = vmatprep.subr.mxu0 %v83
    %449 = vmatpush1.msra.mxu0 %v82
    %450 = vmatprep.subr.mxu0 %v91
    %451 = vmatpush1.msra.mxu0 %v90
    %452 = vmatprep.subr.mxu0 %v99
    %453 = vmatpush1.msra.mxu0 %v98
    %454 = vmatprep.subr.mxu0 %v107
    %455 = vmatpush1.msra.mxu0 %v106
    %456 = vmatprep.subr.mxu0 %v115
    %457 = vmatpush1.msra.mxu0 %v114
    %458 = vmatprep.subr.mxu0 %v123
    %459 = vmatpush1.msra.mxu0 %v122
    %460 = vmatprep.subr.mxu0 %v131
    %461 = vmatpush1.msra.mxu0 %v130
    %462 = vmatprep.subr.mxu0 %v139
    %463 = vmatpush1.msra.mxu0 %v138
    %464 = vmatprep.subr.mxu0 %v147
    %465 = vmatpush1.msra.mxu0 %v146
    %466 = vmatprep.subr.mxu0 %v155
    %467 = vmatpush1.msra.mxu0 %v154
    %468 = vmatprep.subr.mxu0 %v163
    %469 = vmatpush1.msra.mxu0 %v162
    %470 = vmatprep.subr.mxu0 %v171
    %471 = vmatpush1.msra.mxu0 %v170
    %472 = vmatprep.subr.mxu0 %v179
    %473 = vmatpush1.msra.mxu0 %v178
    %474 = vmatprep.subr.mxu0 %v187
    %475 = vmatpush1.msra.mxu0 %v186
    %476 = vmatprep.subr.mxu0 %v195
    %477 = vmatpush1.msra.mxu0 %v194
    %478 = vmatprep.subr.mxu0 %v203
    %479 = vmatpush1.msra.mxu0 %v202
    %480 = vmatprep.subr.mxu0 %v211
    %481 = vmatpush1.msra.mxu0 %v210
    %482 = vmatprep.subr.mxu0 %v219
    %483 = vmatpush1.msra.mxu0 %v218
    %484 = vmatprep.subr.mxu0 %v227
    %485 = vmatpush1.msra.mxu0 %v226
    %486 = vmatprep.subr.mxu0 %v235
    %487 = vmatpush1.msra.mxu0 %v234
    %488 = vmatprep.subr.mxu0 %v243
    %489 = vmatpush1.msra.mxu0 %v242
    %490 = vmatprep.subr.mxu0 %v251
    %491 = vmatpush1.msra.mxu0 %v250
    %492 = vmatprep.subr.mxu0 %v259
    %493 = vmatpush1.msra.mxu0 %v258
    %494 = vmatprep.subr.mxu0 %v267
    %495 = vmatpush1.msra.mxu0 %v266
    %496 = vmatprep.subr.mxu0 %v275
    %497 = vmatpush1.msra.mxu0 %v274
    %498 = vmatprep.subr.mxu0 %v283
    %499 = vmatpush1.msra.mxu0 %v282
    %500 = vmatprep.subr.mxu0 %v291
    %501 = vmatpush1.msra.mxu0 %v290
    %502 = vmatprep.mubr.f32.mxu0 %v295
    %503 = vmatmul.mubr.f32.gmra.mrb[0].mxu0 %v294
    %v504 = vpop.f32.mrb[0].mxu0
    %v505 = vadd.f32 0.0, %v504
    %v506 = vpop.f32.mrb[0].mxu0
    %v507 = vadd.f32 0.0, %v506
    %508 = vdwg.mxu0
    %509 = vmatprep.subr.mxu0 %v45
    %510 = vmatpush1.msra.mxu0 %v44
    %511 = vmatprep.subr.mxu0 %v53
    %512 = vmatpush1.msra.mxu0 %v52
    %513 = vmatprep.subr.mxu0 %v61
    %514 = vmatpush1.msra.mxu0 %v60
    %515 = vmatprep.subr.mxu0 %v69
    %516 = vmatpush1.msra.mxu0 %v68
    %517 = vmatprep.subr.mxu0 %v77
    %518 = vmatpush1.msra.mxu0 %v76
    %519 = vmatprep.subr.mxu0 %v85
    %520 = vmatpush1.msra.mxu0 %v84
    %521 = vmatprep.subr.mxu0 %v93
    %522 = vmatpush1.msra.mxu0 %v92
    %523 = vmatprep.subr.mxu0 %v101
    %524 = vmatpush1.msra.mxu0 %v100
    %525 = vmatprep.subr.mxu0 %v109
    %526 = vmatpush1.msra.mxu0 %v108
    %527 = vmatprep.subr.mxu0 %v117
    %528 = vmatpush1.msra.mxu0 %v116
    %529 = vmatprep.subr.mxu0 %v125
    %530 = vmatpush1.msra.mxu0 %v124
    %531 = vmatprep.subr.mxu0 %v133
    %532 = vmatpush1.msra.mxu0 %v132
    %533 = vmatprep.subr.mxu0 %v141
    %534 = vmatpush1.msra.mxu0 %v140
    %535 = vmatprep.subr.mxu0 %v149
    %536 = vmatpush1.msra.mxu0 %v148
    %537 = vmatprep.subr.mxu0 %v157
    %538 = vmatpush1.msra.mxu0 %v156
    %539 = vmatprep.subr.mxu0 %v165
    %540 = vmatpush1.msra.mxu0 %v164
    %541 = vmatprep.subr.mxu0 %v173
    %542 = vmatpush1.msra.mxu0 %v172
    %543 = vmatprep.subr.mxu0 %v181
    %544 = vmatpush1.msra.mxu0 %v180
    %545 = vmatprep.subr.mxu0 %v189
    %546 = vmatpush1.msra.mxu0 %v188
    %547 = vmatprep.subr.mxu0 %v197
    %548 = vmatpush1.msra.mxu0 %v196
    %549 = vmatprep.subr.mxu0 %v205
    %550 = vmatpush1.msra.mxu0 %v204
    %551 = vmatprep.subr.mxu0 %v213
    %552 = vmatpush1.msra.mxu0 %v212
    %553 = vmatprep.subr.mxu0 %v221
    %554 = vmatpush1.msra.mxu0 %v220
    %555 = vmatprep.subr.mxu0 %v229
    %556 = vmatpush1.msra.mxu0 %v228
    %557 = vmatprep.subr.mxu0 %v237
    %558 = vmatpush1.msra.mxu0 %v236
    %559 = vmatprep.subr.mxu0 %v245
    %560 = vmatpush1.msra.mxu0 %v244
    %561 = vmatprep.subr.mxu0 %v253
    %562 = vmatpush1.msra.mxu0 %v252
    %563 = vmatprep.subr.mxu0 %v261
    %564 = vmatpush1.msra.mxu0 %v260
    %565 = vmatprep.subr.mxu0 %v269
    %566 = vmatpush1.msra.mxu0 %v268
    %567 = vmatprep.subr.mxu0 %v277
    %568 = vmatpush1.msra.mxu0 %v276
    %569 = vmatprep.subr.mxu0 %v285
    %570 = vmatpush1.msra.mxu0 %v284
    %571 = vmatprep.subr.mxu0 %v293
    %572 = vmatpush1.msra.mxu0 %v292
    %573 = vmatprep.mubr.f32.mxu0 %v295
    %574 = vmatmul.mubr.f32.gmra.mrb[0].mxu0 %v294
    %v575 = vpop.f32.mrb[0].mxu0
    %v576 = vadd.f32 0.0, %v575
    %v577 = vpop.f32.mrb[0].mxu0
    %v578 = vadd.f32 0.0, %v577
    %579 = vdwg.mxu0
    %580 = vst [vmem:[#allocation7] sm:$0xff] %v363
    %581 = vst [vmem:[#allocation7 + $0x8] sm:$0xff] %v365
    %582 = vst [vmem:[#allocation7 + $0x10] sm:$0xff] %v434
    %583 = vst [vmem:[#allocation7 + $0x18] sm:$0xff] %v436
    %584 = vst [vmem:[#allocation7 + $0x20] sm:$0xff] %v505
    %585 = vst [vmem:[#allocation7 + $0x28] sm:$0xff] %v507
    %586 = vst [vmem:[#allocation7 + $0x30] sm:$0xff] %v576
    %587 = vst [vmem:[#allocation7 + $0x38] sm:$0xff] %v578
    // Predicated region
    $region18: #{tpu_custom_call.1} parent=1 // pred_check
      _
    $region19: #{tpu_custom_call.1} parent=1 // pred_check_branch
      %589 = sbr.rel (0) target = $region21
    $region20: #{tpu_custom_call.1} parent=1 // pred_region
      %s591 = ssub.s32 1024, 1024
      %592 = vsyncadd [#allocation4], %s591
      %s594 = sshll.u32 [#allocation7], 4
      %s595 = int_to_ptr.vmem [resolvable:$true] %s594
      %597 = dma.vmem_to_hbm [thread:$0]  %s595, 1024, %s2, [#allocation4]
    $region21: #{tpu_custom_call.1} parent=1 // pred_fallthru
      _
    // Predicated region
    $region22: #{tpu_custom_call.1} parent=1 // pred_check
      _
    $region23: #{tpu_custom_call.1} parent=1 // pred_check_branch
      %599 = sbr.rel (0) target = $region25
    $region24: #{tpu_custom_call.1} parent=1 // pred_region
      %600 = dma.done [#allocation4], 1024
    $region25: #{tpu_custom_call.1} parent=1 // pred_fallthru
      _
    %601 = vsyncpa [#allocation3], 1
    %602 = vsyncpa [#allocation6], 1
    %603 = vsyncpa [#allocation4], 1

</llo_original>
